<compile_context>
chip_gen: v5e
topology: v5e:2x2
jax: 0.10.0
libtpu: 0.0.40
codegen_flags: <defaults>
</compile_context>

<pallas_src>
import functools
import math

import jax
import jax.numpy as jnp
from jax import lax
from jax.experimental import pallas as pl
from jax.experimental.pallas import tpu as pltpu


# ----------------------------------------------------------------------------
# helpers
# ----------------------------------------------------------------------------
def _row_tile(m, target=512):
    """Largest multiple-of-8 row tile that divides m, preferring >=2 grid steps."""
    cands = [t for t in range(8, min(m, target) + 1, 8) if m % t == 0]
    if not cands:
        return m
    multi = [t for t in cands if m // t >= 2]
    return max(multi) if multi else max(cands)


def _default_vmem_limit():
    # v5e/v6e: 128 MiB physical VMEM, v7x: 64 MiB.  Leave headroom for Mosaic scratch.
    try:
        info = pltpu.get_tpu_info()
        phys = getattr(info, "vmem_capacity_bytes", 64 * 1024 * 1024)
    except Exception:
        phys = 64 * 1024 * 1024
    return int(min(phys * 3 // 4, 96 * 1024 * 1024))


_VMEM_LIMIT = _default_vmem_limit()
_NEG_INF = -1e9


# ----------------------------------------------------------------------------
# shared attention tail (all-heads attention + Wo fold + residual + LayerNorm)
# ----------------------------------------------------------------------------
def _attn_tail(q, k, v, bias, wo_ref, bo_ref, residual, g_ref, bt_ref, o_ref, n_head):
    """q is already scaled by 1/sqrt(dk); q/k/v are f32 accumulator outputs."""
    tq, d_model = q.shape
    dk = d_model // n_head

    # One bf16 cast per tensor (hoisted out of the head loop).
    qb = q.astype(jnp.bfloat16)
    kb = k.astype(jnp.bfloat16)
    vb = v.astype(jnp.bfloat16)

    acc = jnp.zeros((tq, d_model), jnp.float32)
    # TODO(synk): at production dk (64/128) a single head-batched dot_general would fill
    # the 256-wide MXU better than this static unroll (v6e/v7x note from the review).
    for h in range(n_head):
        sl = slice(h * dk, (h + 1) * dk)
        # QK^T without explicit transpose: contract the last dims directly.
        s = lax.dot_general(qb[:, sl], kb[:, sl],
                            (((1,), (1,)), ((), ())),
                            preferred_element_type=jnp.float32)            # (tq, Sk)
        s = s + bias                                                        # f32 add
        m = jnp.max(s, axis=-1, keepdims=True)
        p = jnp.exp(s - m)
        p = p * pl.reciprocal(jnp.sum(p, axis=-1, keepdims=True), approx=True)
        oh = jnp.dot(p.astype(jnp.bfloat16), vb[:, sl],
                     preferred_element_type=jnp.float32)                    # (tq, dk)
        # Fold this head straight into the output projection (no lane-unaligned concat).
        acc = acc + jnp.dot(oh.astype(jnp.bfloat16), wo_ref[sl, :],
                            preferred_element_type=jnp.float32)             # (tq, D)

    y = acc + bo_ref[...] + residual
    mean = jnp.mean(y, axis=-1, keepdims=True)
    var = jnp.mean(jnp.square(y - mean), axis=-1, keepdims=True)
    o_ref[0] = ((y - mean) * lax.rsqrt(var + 1e-5) * g_ref[...]
                + bt_ref[...]).astype(o_ref.dtype)


# ----------------------------------------------------------------------------
# Pallas kernels
# ----------------------------------------------------------------------------
def _self_attn_kernel(n_head, x_ref, bias_ref,
                      wqkv_ref, bqkv_ref, wo_ref, bo_ref, g_ref, bt_ref, o_ref):
    """Self-attention: fused (D,3D) QKV projection, one program per batch element."""
    x = x_ref[0]                                          # (Sq, D) bf16 (also residual)
    d_model = x.shape[-1]
    dk = d_model // n_head
    inv_sqrt_dk = 1.0 / math.sqrt(dk)

    bias = bias_ref[0].astype(jnp.float32)                # (Sq, Sq) additive mask bias

    qkv = jnp.dot(x, wqkv_ref[...],
                  preferred_element_type=jnp.float32) + bqkv_ref[...]       # (Sq, 3D)
    q = qkv[:, :d_model] * inv_sqrt_dk                    # scale folded once into q
    k = qkv[:, d_model:2 * d_model]
    v = qkv[:, 2 * d_model:]

    _attn_tail(q, k, v, bias, wo_ref, bo_ref, x.astype(jnp.float32),
               g_ref, bt_ref, o_ref, n_head)


def _cross_attn_kernel(n_head, xq_ref, xkv_ref, bias_ref,
                       wq_ref, bq_ref, wkv_ref, bkv_ref,
                       wo_ref, bo_ref, g_ref, bt_ref, o_ref):
    """Cross-attention: one program per (batch, Sq tile); K/V from full enc_src."""
    xq = xq_ref[0]                                        # (tq, D) bf16 (also residual)
    xkv = xkv_ref[0]                                      # (Sk, D) bf16
    d_model = xq.shape[-1]
    dk = d_model // n_head
    inv_sqrt_dk = 1.0 / math.sqrt(dk)

    bias = bias_ref[0].astype(jnp.float32)                # (1, Sk) -> broadcasts to (tq, Sk)

    q = (jnp.dot(xq, wq_ref[...],
                 preferred_element_type=jnp.float32) + bq_ref[...]) * inv_sqrt_dk
    kv = jnp.dot(xkv, wkv_ref[...],
                 preferred_element_type=jnp.float32) + bkv_ref[...]         # (Sk, 2D)
    k = kv[:, :d_model]
    v = kv[:, d_model:]

    _attn_tail(q, k, v, bias, wo_ref, bo_ref, xq.astype(jnp.float32),
               g_ref, bt_ref, o_ref, n_head)


def _ffn_ln_kernel(x_ref, w1_ref, b1_ref, w2_ref, b2_ref, g_ref, bt_ref, o_ref):
    """Fused position-wise FFN + residual add + LayerNorm over one row tile."""
    x = x_ref[...]                                        # (tm, D) bf16 (also residual)
    h = jnp.dot(x, w1_ref[...], preferred_element_type=jnp.float32) + b1_ref[...]
    h = jnp.maximum(h, 0.0)
    y = jnp.dot(h.astype(jnp.bfloat16), w2_ref[...],
                preferred_element_type=jnp.float32) + b2_ref[...]
    y = y + x.astype(jnp.float32)
    mean = jnp.mean(y, axis=-1, keepdims=True)
    var = jnp.mean(jnp.square(y - mean), axis=-1, keepdims=True)
    o_ref[...] = ((y - mean) * lax.rsqrt(var + 1e-5) * g_ref[...]
                  + bt_ref[...]).astype(o_ref.dtype)


# ----------------------------------------------------------------------------
# pallas_call wrappers
# ----------------------------------------------------------------------------
# TODO(synk): constant-index weight BlockSpecs could use pipeline_mode=pl.Buffered(1) to
# drop their second buffer; left default-buffered here for maximum lowering portability.

def self_attention_block(x, bias, wqkv, bqkv, wo, bo, gamma, beta, *, n_head):
    B, Sq, D = x.shape
    return pl.pallas_call(
        functools.partial(_self_attn_kernel, n_head),
        grid=(B,),
        in_specs=[
            pl.BlockSpec((1, Sq, D), lambda b: (b, 0, 0)),      # x (bf16, also residual)
            pl.BlockSpec((1, Sq, Sq), lambda b: (b, 0, 0)),     # additive mask bias (bf16)
            pl.BlockSpec((D, 3 * D), lambda b: (0, 0)),         # fused Wq|Wk|Wv (bf16)
            pl.BlockSpec((1, 3 * D), lambda b: (0, 0)),         # fused bq|bk|bv
            pl.BlockSpec((D, D), lambda b: (0, 0)),             # Wo
            pl.BlockSpec((1, D), lambda b: (0, 0)),             # bo
            pl.BlockSpec((1, D), lambda b: (0, 0)),             # LN gamma
            pl.BlockSpec((1, D), lambda b: (0, 0)),             # LN beta
        ],
        out_specs=pl.BlockSpec((1, Sq, D), lambda b: (b, 0, 0)),
        out_shape=jax.ShapeDtypeStruct((B, Sq, D), jnp.bfloat16),
        compiler_params=pltpu.CompilerParams(
            dimension_semantics=("parallel",),
            vmem_limit_bytes=_VMEM_LIMIT,
        ),
    )(x, bias, wqkv, bqkv, wo, bo, gamma, beta)


def cross_attention_block(x_q, x_kv, bias, wq, bq, wkv, bkv, wo, bo, gamma, beta,
                          *, n_head):
    B, Sq, D = x_q.shape
    Sk = x_kv.shape[1]
    tq = _row_tile(Sq)                                     # Sq tiling -> pipeline depth
    return pl.pallas_call(
        functools.partial(_cross_attn_kernel, n_head),
        grid=(B, Sq // tq),
        in_specs=[
            pl.BlockSpec((1, tq, D), lambda b, i: (b, i, 0)),   # x_q tile (+ residual)
            pl.BlockSpec((1, Sk, D), lambda b, i: (b, 0, 0)),   # enc_src (full Sk)
            pl.BlockSpec((1, 1, Sk), lambda b, i: (b, 0, 0)),   # src mask bias (B,1,Sk)
            pl.BlockSpec((D, D), lambda b, i: (0, 0)),          # Wq
            pl.BlockSpec((1, D), lambda b, i: (0, 0)),          # bq
            pl.BlockSpec((D, 2 * D), lambda b, i: (0, 0)),      # fused Wk|Wv
            pl.BlockSpec((1, 2 * D), lambda b, i: (0, 0)),      # fused bk|bv
            pl.BlockSpec((D, D), lambda b, i: (0, 0)),          # Wo
            pl.BlockSpec((1, D), lambda b, i: (0, 0)),          # bo
            pl.BlockSpec((1, D), lambda b, i: (0, 0)),          # LN gamma
            pl.BlockSpec((1, D), lambda b, i: (0, 0)),          # LN beta
        ],
        out_specs=pl.BlockSpec((1, tq, D), lambda b, i: (b, i, 0)),
        out_shape=jax.ShapeDtypeStruct((B, Sq, D), jnp.bfloat16),
        compiler_params=pltpu.CompilerParams(
            dimension_semantics=("parallel", "parallel"),
            vmem_limit_bytes=_VMEM_LIMIT,
        ),
    )(x_q, x_kv, bias, wq, bq, wkv, bkv, wo, bo, gamma, beta)


def ffn_block(x, w1, b1, w2, b2, gamma, beta):
    B, S, D = x.shape
    M = B * S
    F = w1.shape[1]
    tm = _row_tile(M)
    y = pl.pallas_call(
        _ffn_ln_kernel,
        grid=(M // tm,),
        in_specs=[
            pl.BlockSpec((tm, D), lambda i: (i, 0)),            # x tile (bf16, + residual)
            pl.BlockSpec((D, F), lambda i: (0, 0)),             # W1 (bf16, resident)
            pl.BlockSpec((1, F), lambda i: (0, 0)),
            pl.BlockSpec((F, D), lambda i: (0, 0)),             # W2
            pl.BlockSpec((1, D), lambda i: (0, 0)),
            pl.BlockSpec((1, D), lambda i: (0, 0)),             # LN gamma
            pl.BlockSpec((1, D), lambda i: (0, 0)),             # LN beta
        ],
        out_specs=pl.BlockSpec((tm, D), lambda i: (i, 0)),
        out_shape=jax.ShapeDtypeStruct((M, D), jnp.bfloat16),
        compiler_params=pltpu.CompilerParams(
            dimension_semantics=("parallel",),
            vmem_limit_bytes=_VMEM_LIMIT,
        ),
    )(x.reshape(M, D), w1, b1, w2, b2, gamma, beta)
    return y.reshape(B, S, D)


# ----------------------------------------------------------------------------
# Model glue
# ----------------------------------------------------------------------------
def decoder_layer(x, enc_src, trg_bias, src_bias, lp, n_head):
    # masked self-attention + add&norm (fused QKV, one pallas_call)
    x = self_attention_block(x, trg_bias,
                             lp["self_wqkv"], lp["self_bqkv"],
                             lp["self_wo"], lp["self_bo"],
                             lp["ln1"][0], lp["ln1"][1], n_head=n_head)
    # encoder-decoder cross attention + add&norm (one pallas_call)
    x = cross_attention_block(x, enc_src, src_bias,
                              lp["cross_wq"], lp["cross_bq"],
                              lp["cross_wkv"], lp["cross_bkv"],
                              lp["cross_wo"], lp["cross_bo"],
                              lp["ln2"][0], lp["ln2"][1], n_head=n_head)
    # position-wise feed-forward + add&norm (one pallas_call)
    x = ffn_block(x, lp["ffn_w1"], lp["ffn_b1"], lp["ffn_w2"], lp["ffn_b2"],
                  lp["ln3"][0], lp["ln3"][1])
    return x


def sinusoid_table(n_position, d_model):
    pos = jnp.arange(n_position, dtype=jnp.float32)[:, None]
    i = jnp.arange(d_model)[None, :]
    angle = pos / jnp.power(10000.0, (2 * (i // 2)).astype(jnp.float32) / d_model)
    return jnp.where(i % 2 == 0, jnp.sin(angle), jnp.cos(angle)).astype(jnp.float32)


def decoder_forward(trg, enc_src, trg_mask, src_mask, params, n_head, n_position=512):
    B, Sq = trg.shape
    Sk = enc_src.shape[1]
    D = params["emb"].shape[1]

    # TODO(synk): token-embedding gather (data-dependent row gather) stays in plain JAX.
    # Embedding scale + positional add are elementwise & memory-bound -> fused by XLA
    # into the gather consumer instead of a dedicated pallas_call round trip.
    emb = jnp.take(params["emb"], trg, axis=0)                       # (B, Sq, D) f32
    pe = sinusoid_table(n_position, D)[:Sq]                          # (Sq, D)
    x = (emb * math.sqrt(D) + pe[None]).astype(jnp.bfloat16)         # bf16 activation stream
    # dropout == identity (inference)

    enc_src_bf = enc_src.astype(jnp.bfloat16)

    # Masks -> additive bias, stored bf16 (2x less HBM traffic than int32); the bias add
    # and softmax stay in f32 inside the kernels.  Cross mask is (B, 1, Sk): no Sq-fold
    # broadcast materialization.
    trg_keep = trg_mask[:, 0] != 0                                   # (B, Sq, Sq)
    src_keep = src_mask[:, 0, 0] != 0                                # (B, Sk)
    trg_bias = jnp.where(trg_keep, 0.0, _NEG_INF).astype(jnp.bfloat16)
    src_bias = jnp.where(src_keep, 0.0, _NEG_INF).astype(jnp.bfloat16)[:, None, :]

    for lp in params["layers"]:
        x = decoder_layer(x, enc_src_bf, trg_bias, src_bias, lp, n_head)
    return x.astype(jnp.float32)


# ----------------------------------------------------------------------------
# Deterministic parameter initialization (synthetic); matmul weights stored in bf16
# ----------------------------------------------------------------------------
def init_params(key, vocab, d_model, ffn_hidden, n_layers, pad_idx):
    k_emb, k_layer = jax.random.split(key, 2)

    def dense(k, fan_in, fan_out):
        w = (jax.random.normal(k, (fan_in, fan_out), jnp.float32) * 0.02).astype(jnp.bfloat16)
        b = jnp.zeros((1, fan_out), jnp.float32)
        return w, b

    emb = jax.random.normal(k_emb, (vocab, d_model), jnp.float32) * 0.02
    emb = emb.at[pad_idx].set(0.0)

    ks = jax.random.split(k_layer, 10)
    ones = jnp.ones((1, d_model), jnp.float32)
    zeros = jnp.zeros((1, d_model), jnp.float32)

    # self-attention: fused (D, 3D) QKV projection
    swq, sbq = dense(ks[0], d_model, d_model)
    swk, sbk = dense(ks[1], d_model, d_model)
    swv, sbv = dense(ks[2], d_model, d_model)
    self_wqkv = jnp.concatenate([swq, swk, swv], axis=1)
    self_bqkv = jnp.concatenate([sbq, sbk, sbv], axis=1)
    self_wo, self_bo = dense(ks[3], d_model, d_model)

    # cross-attention: Q separate, fused (D, 2D) KV projection
    cross_wq, cross_bq = dense(ks[4], d_model, d_model)
    cwk, cbk = dense(ks[5], d_model, d_model)
    cwv, cbv = dense(ks[6], d_model, d_model)
    cross_wkv = jnp.concatenate([cwk, cwv], axis=1)
    cross_bkv = jnp.concatenate([cbk, cbv], axis=1)
    cross_wo, cross_bo = dense(ks[7], d_model, d_model)

    ffn_w1, ffn_b1 = dense(ks[8], d_model, ffn_hidden)
    ffn_w2, ffn_b2 = dense(ks[9], ffn_hidden, d_model)

    layer = dict(
        self_wqkv=self_wqkv, self_bqkv=self_bqkv, self_wo=self_wo, self_bo=self_bo,
        cross_wq=cross_wq, cross_bq=cross_bq, cross_wkv=cross_wkv, cross_bkv=cross_bkv,
        cross_wo=cross_wo, cross_bo=cross_bo,
        ffn_w1=ffn_w1, ffn_b1=ffn_b1, ffn_w2=ffn_w2, ffn_b2=ffn_b2,
        ln1=(ones, zeros), ln2=(ones, zeros), ln3=(ones, zeros),
    )
    # copy.deepcopy(decoder_layer) -> every layer starts with identical weights
    layers = [layer for _ in range(n_layers)]
    return dict(emb=emb, layers=layers)


# ----------------------------------------------------------------------------
if __name__ == "__main__":
    B, S_TRG, S_SRC = 2, 8, 12
    D_MODEL, N_HEAD, FFN_HIDDEN, N_LAYERS = 32, 4, 64, 2
    VOCAB, PAD_IDX = 50, 0

    key = jax.random.PRNGKey(0)
    k_trg, k_enc, k_par = jax.random.split(key, 3)

    trg = jax.random.randint(k_trg, (B, S_TRG), 1, VOCAB)
    trg = trg.at[0, -2:].set(PAD_IDX)                                 # some padding tokens
    enc_src = jax.random.normal(k_enc, (B, S_SRC, D_MODEL), jnp.float32)

    # masks in the usual PyTorch convention: trg_mask (B,1,Sq,Sq), src_mask (B,1,1,Sk)
    pad_mask = (trg != PAD_IDX)[:, None, None, :]                     # (B,1,1,Sq)
    causal = jnp.tril(jnp.ones((S_TRG, S_TRG), bool))[None, None]     # (1,1,Sq,Sq)
    trg_mask = (pad_mask & causal).astype(jnp.float32)                # (B,1,Sq,Sq)
    src_mask = jnp.ones((B, 1, 1, S_SRC), jnp.float32)                # (B,1,1,Sk)

    params = init_params(k_par, VOCAB, D_MODEL, FFN_HIDDEN, N_LAYERS, PAD_IDX)

    out = decoder_forward(trg, enc_src, trg_mask, src_mask, params, N_HEAD)
    jax.block_until_ready(out)
    assert out.shape == (B, S_TRG, D_MODEL)
    assert bool(jnp.all(jnp.isfinite(out)))
    print("KERNEL_OK")
</pallas_src>

<mosaic_0001>
module attributes {stable_mosaic.version = 11 : i64} {
  func.func @_self_attn_kernel(%arg0: i32, %arg1: memref<1x8x32xbf16, #tpu.memory_space<vmem>>, %arg2: memref<1x8x8xbf16, #tpu.memory_space<vmem>>, %arg3: memref<32x96xbf16, #tpu.memory_space<vmem>>, %arg4: memref<1x96xf32, #tpu.memory_space<vmem>>, %arg5: memref<32x32xbf16, #tpu.memory_space<vmem>>, %arg6: memref<1x32xf32, #tpu.memory_space<vmem>>, %arg7: memref<1x32xf32, #tpu.memory_space<vmem>>, %arg8: memref<1x32xf32, #tpu.memory_space<vmem>>, %arg9: memref<1x8x32xbf16, #tpu.memory_space<vmem>>) attributes {dimension_semantics = [#tpu.dimension_semantics<parallel>], iteration_bounds = array<i64: 2>, scalar_prefetch = 0 : i64, scratch_operands = 0 : i64, tpu.core_type = #tpu.core_type<tc>, window_params = [{transform_indices = @transform_0, window_bounds = array<i64: 1, 8, 32>}, {transform_indices = @transform_1, window_bounds = array<i64: 1, 8, 8>}, {pipeline_mode = #tpu.pipeline_mode<synchronous>, transform_indices = @transform_2, window_bounds = array<i64: 32, 96>}, {pipeline_mode = #tpu.pipeline_mode<synchronous>, transform_indices = @transform_3, window_bounds = array<i64: 1, 96>}, {pipeline_mode = #tpu.pipeline_mode<synchronous>, transform_indices = @transform_4, window_bounds = array<i64: 32, 32>}, {pipeline_mode = #tpu.pipeline_mode<synchronous>, transform_indices = @transform_5, window_bounds = array<i64: 1, 32>}, {pipeline_mode = #tpu.pipeline_mode<synchronous>, transform_indices = @transform_6, window_bounds = array<i64: 1, 32>}, {pipeline_mode = #tpu.pipeline_mode<synchronous>, transform_indices = @transform_7, window_bounds = array<i64: 1, 32>}, {transform_indices = @transform_8, window_bounds = array<i64: 1, 8, 32>}]} {
    %c0 = arith.constant 0 : index
    %c0_0 = arith.constant 0 : index
    %c0_1 = arith.constant 0 : index
    %0 = vector.load %arg1[%c0, %c0_0, %c0_1] : memref<1x8x32xbf16, #tpu.memory_space<vmem>>, vector<1x8x32xbf16>
    %1 = vector.shape_cast %0 : vector<1x8x32xbf16> to vector<8x32xbf16>
    %c0_2 = arith.constant 0 : index
    %c0_3 = arith.constant 0 : index
    %c0_4 = arith.constant 0 : index
    %2 = vector.load %arg2[%c0_2, %c0_3, %c0_4] : memref<1x8x8xbf16, #tpu.memory_space<vmem>>, vector<1x8x8xbf16>
    %3 = vector.shape_cast %2 : vector<1x8x8xbf16> to vector<8x8xbf16>
    %4 = arith.extf %3 : vector<8x8xbf16> to vector<8x8xf32>
    %c0_5 = arith.constant 0 : index
    %c0_6 = arith.constant 0 : index
    %5 = vector.load %arg3[%c0_5, %c0_6] : memref<32x96xbf16, #tpu.memory_space<vmem>>, vector<32x96xbf16>
    %cst = arith.constant dense<0.000000e+00> : vector<8x96xf32>
    %6 = tpu.matmul %1, %5, %cst {dimension_numbers = #tpu.dot_dimension_numbers<[1], [0], [0], [1], [0, 0, 1, 1], [], []>} : vector<8x32xbf16>, vector<32x96xbf16>, vector<8x96xf32> -> vector<8x96xf32>
    %c0_7 = arith.constant 0 : index
    %c0_8 = arith.constant 0 : index
    %7 = vector.load %arg4[%c0_7, %c0_8] : memref<1x96xf32, #tpu.memory_space<vmem>>, vector<1x96xf32>
    %8 = vector.broadcast %7 : vector<1x96xf32> to vector<8x96xf32>
    %9 = arith.addf %6, %8 : vector<8x96xf32>
    %10 = vector.extract_strided_slice %9 {offsets = [0, 0], sizes = [8, 32], strides = [1, 1]} : vector<8x96xf32> to vector<8x32xf32>
    %cst_9 = arith.constant 0.353553385 : f32
    %11 = vector.broadcast %cst_9 : f32 to vector<8x32xf32>
    %12 = arith.mulf %10, %11 : vector<8x32xf32>
    %13 = vector.extract_strided_slice %9 {offsets = [0, 32], sizes = [8, 32], strides = [1, 1]} : vector<8x96xf32> to vector<8x32xf32>
    %14 = vector.extract_strided_slice %9 {offsets = [0, 64], sizes = [8, 32], strides = [1, 1]} : vector<8x96xf32> to vector<8x32xf32>
    %15 = arith.extf %1 : vector<8x32xbf16> to vector<8x32xf32>
    %16 = arith.truncf %12 : vector<8x32xf32> to vector<8x32xbf16>
    %17 = arith.truncf %13 : vector<8x32xf32> to vector<8x32xbf16>
    %18 = arith.truncf %14 : vector<8x32xf32> to vector<8x32xbf16>
    %cst_10 = arith.constant 0.000000e+00 : f32
    %19 = vector.broadcast %cst_10 : f32 to vector<8x32xf32>
    %20 = vector.extract_strided_slice %16 {offsets = [0, 0], sizes = [8, 8], strides = [1, 1]} : vector<8x32xbf16> to vector<8x8xbf16>
    %21 = vector.extract_strided_slice %17 {offsets = [0, 0], sizes = [8, 8], strides = [1, 1]} : vector<8x32xbf16> to vector<8x8xbf16>
    %cst_11 = arith.constant dense<0.000000e+00> : vector<8x8xf32>
    %22 = tpu.matmul %20, %21, %cst_11 {dimension_numbers = #tpu.dot_dimension_numbers<[1], [1], [0], [0], [0, 0, 1, 0], [], []>} : vector<8x8xbf16>, vector<8x8xbf16>, vector<8x8xf32> -> vector<8x8xf32>
    %23 = arith.addf %22, %4 : vector<8x8xf32>
    %cst_12 = arith.constant dense<0xFF800000> : vector<8xf32>
    %24 = vector.multi_reduction <maximumf>, %23, %cst_12 [1] : vector<8x8xf32> to vector<8xf32>
    %25 = vector.shape_cast %24 : vector<8xf32> to vector<8x1xf32>
    %26 = vector.broadcast %25 : vector<8x1xf32> to vector<8x8xf32>
    %27 = arith.subf %23, %26 : vector<8x8xf32>
    %28 = math.exp %27 : vector<8x8xf32>
    %cst_13 = arith.constant dense<0.000000e+00> : vector<8xf32>
    %29 = vector.multi_reduction <add>, %28, %cst_13 [1] : vector<8x8xf32> to vector<8xf32>
    %30 = vector.shape_cast %29 : vector<8xf32> to vector<8x1xf32>
    %31 = tpu.reciprocal %30 {approx = true} : vector<8x1xf32> -> vector<8x1xf32>
    %32 = vector.broadcast %31 : vector<8x1xf32> to vector<8x8xf32>
    %33 = arith.mulf %28, %32 : vector<8x8xf32>
    %34 = arith.truncf %33 : vector<8x8xf32> to vector<8x8xbf16>
    %35 = vector.extract_strided_slice %18 {offsets = [0, 0], sizes = [8, 8], strides = [1, 1]} : vector<8x32xbf16> to vector<8x8xbf16>
    %cst_14 = arith.constant dense<0.000000e+00> : vector<8x8xf32>
    %36 = tpu.matmul %34, %35, %cst_14 {dimension_numbers = #tpu.dot_dimension_numbers<[1], [0], [0], [1], [0, 0, 1, 1], [], []>} : vector<8x8xbf16>, vector<8x8xbf16>, vector<8x8xf32> -> vector<8x8xf32>
    %37 = arith.truncf %36 : vector<8x8xf32> to vector<8x8xbf16>
    %c0_15 = arith.constant 0 : index
    %c0_16 = arith.constant 0 : index
    %38 = vector.load %arg5[%c0_15, %c0_16] : memref<32x32xbf16, #tpu.memory_space<vmem>>, vector<8x32xbf16>
    %cst_17 = arith.constant dense<0.000000e+00> : vector<8x32xf32>
    %39 = tpu.matmul %37, %38, %cst_17 {dimension_numbers = #tpu.dot_dimension_numbers<[1], [0], [0], [1], [0, 0, 1, 1], [], []>} : vector<8x8xbf16>, vector<8x32xbf16>, vector<8x32xf32> -> vector<8x32xf32>
    %40 = arith.addf %19, %39 : vector<8x32xf32>
    %41 = vector.extract_strided_slice %16 {offsets = [0, 8], sizes = [8, 8], strides = [1, 1]} : vector<8x32xbf16> to vector<8x8xbf16>
    %42 = vector.extract_strided_slice %17 {offsets = [0, 8], sizes = [8, 8], strides = [1, 1]} : vector<8x32xbf16> to vector<8x8xbf16>
    %cst_18 = arith.constant dense<0.000000e+00> : vector<8x8xf32>
    %43 = tpu.matmul %41, %42, %cst_18 {dimension_numbers = #tpu.dot_dimension_numbers<[1], [1], [0], [0], [0, 0, 1, 0], [], []>} : vector<8x8xbf16>, vector<8x8xbf16>, vector<8x8xf32> -> vector<8x8xf32>
    %44 = arith.addf %43, %4 : vector<8x8xf32>
    %cst_19 = arith.constant dense<0xFF800000> : vector<8xf32>
    %45 = vector.multi_reduction <maximumf>, %44, %cst_19 [1] : vector<8x8xf32> to vector<8xf32>
    %46 = vector.shape_cast %45 : vector<8xf32> to vector<8x1xf32>
    %47 = vector.broadcast %46 : vector<8x1xf32> to vector<8x8xf32>
    %48 = arith.subf %44, %47 : vector<8x8xf32>
    %49 = math.exp %48 : vector<8x8xf32>
    %cst_20 = arith.constant dense<0.000000e+00> : vector<8xf32>
    %50 = vector.multi_reduction <add>, %49, %cst_20 [1] : vector<8x8xf32> to vector<8xf32>
    %51 = vector.shape_cast %50 : vector<8xf32> to vector<8x1xf32>
    %52 = tpu.reciprocal %51 {approx = true} : vector<8x1xf32> -> vector<8x1xf32>
    %53 = vector.broadcast %52 : vector<8x1xf32> to vector<8x8xf32>
    %54 = arith.mulf %49, %53 : vector<8x8xf32>
    %55 = arith.truncf %54 : vector<8x8xf32> to vector<8x8xbf16>
    %56 = vector.extract_strided_slice %18 {offsets = [0, 8], sizes = [8, 8], strides = [1, 1]} : vector<8x32xbf16> to vector<8x8xbf16>
    %cst_21 = arith.constant dense<0.000000e+00> : vector<8x8xf32>
    %57 = tpu.matmul %55, %56, %cst_21 {dimension_numbers = #tpu.dot_dimension_numbers<[1], [0], [0], [1], [0, 0, 1, 1], [], []>} : vector<8x8xbf16>, vector<8x8xbf16>, vector<8x8xf32> -> vector<8x8xf32>
    %58 = arith.truncf %57 : vector<8x8xf32> to vector<8x8xbf16>
    %c8 = arith.constant 8 : index
    %c0_22 = arith.constant 0 : index
    %59 = vector.load %arg5[%c8, %c0_22] : memref<32x32xbf16, #tpu.memory_space<vmem>>, vector<8x32xbf16>
    %cst_23 = arith.constant dense<0.000000e+00> : vector<8x32xf32>
    %60 = tpu.matmul %58, %59, %cst_23 {dimension_numbers = #tpu.dot_dimension_numbers<[1], [0], [0], [1], [0, 0, 1, 1], [], []>} : vector<8x8xbf16>, vector<8x32xbf16>, vector<8x32xf32> -> vector<8x32xf32>
    %61 = arith.addf %40, %60 : vector<8x32xf32>
    %62 = vector.extract_strided_slice %16 {offsets = [0, 16], sizes = [8, 8], strides = [1, 1]} : vector<8x32xbf16> to vector<8x8xbf16>
    %63 = vector.extract_strided_slice %17 {offsets = [0, 16], sizes = [8, 8], strides = [1, 1]} : vector<8x32xbf16> to vector<8x8xbf16>
    %cst_24 = arith.constant dense<0.000000e+00> : vector<8x8xf32>
    %64 = tpu.matmul %62, %63, %cst_24 {dimension_numbers = #tpu.dot_dimension_numbers<[1], [1], [0], [0], [0, 0, 1, 0], [], []>} : vector<8x8xbf16>, vector<8x8xbf16>, vector<8x8xf32> -> vector<8x8xf32>
    %65 = arith.addf %64, %4 : vector<8x8xf32>
    %cst_25 = arith.constant dense<0xFF800000> : vector<8xf32>
    %66 = vector.multi_reduction <maximumf>, %65, %cst_25 [1] : vector<8x8xf32> to vector<8xf32>
    %67 = vector.shape_cast %66 : vector<8xf32> to vector<8x1xf32>
    %68 = vector.broadcast %67 : vector<8x1xf32> to vector<8x8xf32>
    %69 = arith.subf %65, %68 : vector<8x8xf32>
    %70 = math.exp %69 : vector<8x8xf32>
    %cst_26 = arith.constant dense<0.000000e+00> : vector<8xf32>
    %71 = vector.multi_reduction <add>, %70, %cst_26 [1] : vector<8x8xf32> to vector<8xf32>
    %72 = vector.shape_cast %71 : vector<8xf32> to vector<8x1xf32>
    %73 = tpu.reciprocal %72 {approx = true} : vector<8x1xf32> -> vector<8x1xf32>
    %74 = vector.broadcast %73 : vector<8x1xf32> to vector<8x8xf32>
    %75 = arith.mulf %70, %74 : vector<8x8xf32>
    %76 = arith.truncf %75 : vector<8x8xf32> to vector<8x8xbf16>
    %77 = vector.extract_strided_slice %18 {offsets = [0, 16], sizes = [8, 8], strides = [1, 1]} : vector<8x32xbf16> to vector<8x8xbf16>
    %cst_27 = arith.constant dense<0.000000e+00> : vector<8x8xf32>
    %78 = tpu.matmul %76, %77, %cst_27 {dimension_numbers = #tpu.dot_dimension_numbers<[1], [0], [0], [1], [0, 0, 1, 1], [], []>} : vector<8x8xbf16>, vector<8x8xbf16>, vector<8x8xf32> -> vector<8x8xf32>
    %79 = arith.truncf %78 : vector<8x8xf32> to vector<8x8xbf16>
    %c16 = arith.constant 16 : index
    %c0_28 = arith.constant 0 : index
    %80 = vector.load %arg5[%c16, %c0_28] : memref<32x32xbf16, #tpu.memory_space<vmem>>, vector<8x32xbf16>
    %cst_29 = arith.constant dense<0.000000e+00> : vector<8x32xf32>
    %81 = tpu.matmul %79, %80, %cst_29 {dimension_numbers = #tpu.dot_dimension_numbers<[1], [0], [0], [1], [0, 0, 1, 1], [], []>} : vector<8x8xbf16>, vector<8x32xbf16>, vector<8x32xf32> -> vector<8x32xf32>
    %82 = arith.addf %61, %81 : vector<8x32xf32>
    %83 = vector.extract_strided_slice %16 {offsets = [0, 24], sizes = [8, 8], strides = [1, 1]} : vector<8x32xbf16> to vector<8x8xbf16>
    %84 = vector.extract_strided_slice %17 {offsets = [0, 24], sizes = [8, 8], strides = [1, 1]} : vector<8x32xbf16> to vector<8x8xbf16>
    %cst_30 = arith.constant dense<0.000000e+00> : vector<8x8xf32>
    %85 = tpu.matmul %83, %84, %cst_30 {dimension_numbers = #tpu.dot_dimension_numbers<[1], [1], [0], [0], [0, 0, 1, 0], [], []>} : vector<8x8xbf16>, vector<8x8xbf16>, vector<8x8xf32> -> vector<8x8xf32>
    %86 = arith.addf %85, %4 : vector<8x8xf32>
    %cst_31 = arith.constant dense<0xFF800000> : vector<8xf32>
    %87 = vector.multi_reduction <maximumf>, %86, %cst_31 [1] : vector<8x8xf32> to vector<8xf32>
    %88 = vector.shape_cast %87 : vector<8xf32> to vector<8x1xf32>
    %89 = vector.broadcast %88 : vector<8x1xf32> to vector<8x8xf32>
    %90 = arith.subf %86, %89 : vector<8x8xf32>
    %91 = math.exp %90 : vector<8x8xf32>
    %cst_32 = arith.constant dense<0.000000e+00> : vector<8xf32>
    %92 = vector.multi_reduction <add>, %91, %cst_32 [1] : vector<8x8xf32> to vector<8xf32>
    %93 = vector.shape_cast %92 : vector<8xf32> to vector<8x1xf32>
    %94 = tpu.reciprocal %93 {approx = true} : vector<8x1xf32> -> vector<8x1xf32>
    %95 = vector.broadcast %94 : vector<8x1xf32> to vector<8x8xf32>
    %96 = arith.mulf %91, %95 : vector<8x8xf32>
    %97 = arith.truncf %96 : vector<8x8xf32> to vector<8x8xbf16>
    %98 = vector.extract_strided_slice %18 {offsets = [0, 24], sizes = [8, 8], strides = [1, 1]} : vector<8x32xbf16> to vector<8x8xbf16>
    %cst_33 = arith.constant dense<0.000000e+00> : vector<8x8xf32>
    %99 = tpu.matmul %97, %98, %cst_33 {dimension_numbers = #tpu.dot_dimension_numbers<[1], [0], [0], [1], [0, 0, 1, 1], [], []>} : vector<8x8xbf16>, vector<8x8xbf16>, vector<8x8xf32> -> vector<8x8xf32>
    %100 = arith.truncf %99 : vector<8x8xf32> to vector<8x8xbf16>
    %c24 = arith.constant 24 : index
    %c0_34 = arith.constant 0 : index
    %101 = vector.load %arg5[%c24, %c0_34] : memref<32x32xbf16, #tpu.memory_space<vmem>>, vector<8x32xbf16>
    %cst_35 = arith.constant dense<0.000000e+00> : vector<8x32xf32>
    %102 = tpu.matmul %100, %101, %cst_35 {dimension_numbers = #tpu.dot_dimension_numbers<[1], [0], [0], [1], [0, 0, 1, 1], [], []>} : vector<8x8xbf16>, vector<8x32xbf16>, vector<8x32xf32> -> vector<8x32xf32>
    %103 = arith.addf %82, %102 : vector<8x32xf32>
    %c0_36 = arith.constant 0 : index
    %c0_37 = arith.constant 0 : index
    %104 = vector.load %arg6[%c0_36, %c0_37] : memref<1x32xf32, #tpu.memory_space<vmem>>, vector<1x32xf32>
    %105 = vector.broadcast %104 : vector<1x32xf32> to vector<8x32xf32>
    %106 = arith.addf %103, %105 : vector<8x32xf32>
    %107 = arith.addf %106, %15 : vector<8x32xf32>
    %cst_38 = arith.constant dense<0.000000e+00> : vector<8xf32>
    %108 = vector.multi_reduction <add>, %107, %cst_38 [1] : vector<8x32xf32> to vector<8xf32>
    %109 = vector.shape_cast %108 : vector<8xf32> to vector<8x1xf32>
    %cst_39 = arith.constant 3.200000e+01 : f32
    %110 = vector.broadcast %cst_39 : f32 to vector<8x1xf32>
    %111 = arith.divf %109, %110 : vector<8x1xf32>
    %112 = vector.broadcast %111 : vector<8x1xf32> to vector<8x32xf32>
    %113 = arith.subf %107, %112 : vector<8x32xf32>
    %114 = arith.mulf %113, %113 : vector<8x32xf32>
    %cst_40 = arith.constant dense<0.000000e+00> : vector<8xf32>
    %115 = vector.multi_reduction <add>, %114, %cst_40 [1] : vector<8x32xf32> to vector<8xf32>
    %116 = vector.shape_cast %115 : vector<8xf32> to vector<8x1xf32>
    %cst_41 = arith.constant 3.200000e+01 : f32
    %117 = vector.broadcast %cst_41 : f32 to vector<8x1xf32>
    %118 = arith.divf %116, %117 : vector<8x1xf32>
    %119 = vector.broadcast %111 : vector<8x1xf32> to vector<8x32xf32>
    %120 = arith.subf %107, %119 : vector<8x32xf32>
    %cst_42 = arith.constant 9.99999974E-6 : f32
    %121 = vector.broadcast %cst_42 : f32 to vector<8x1xf32>
    %122 = arith.addf %118, %121 : vector<8x1xf32>
    %123 = math.rsqrt %122 : vector<8x1xf32>
    %124 = vector.broadcast %123 : vector<8x1xf32> to vector<8x32xf32>
    %125 = arith.mulf %120, %124 : vector<8x32xf32>
    %c0_43 = arith.constant 0 : index
    %c0_44 = arith.constant 0 : index
    %126 = vector.load %arg7[%c0_43, %c0_44] : memref<1x32xf32, #tpu.memory_space<vmem>>, vector<1x32xf32>
    %127 = vector.broadcast %126 : vector<1x32xf32> to vector<8x32xf32>
    %128 = arith.mulf %125, %127 : vector<8x32xf32>
    %c0_45 = arith.constant 0 : index
    %c0_46 = arith.constant 0 : index
    %129 = vector.load %arg8[%c0_45, %c0_46] : memref<1x32xf32, #tpu.memory_space<vmem>>, vector<1x32xf32>
    %130 = vector.broadcast %129 : vector<1x32xf32> to vector<8x32xf32>
    %131 = arith.addf %128, %130 : vector<8x32xf32>
    %132 = arith.truncf %131 : vector<8x32xf32> to vector<8x32xbf16>
    %c0_47 = arith.constant 0 : index
    %c0_48 = arith.constant 0 : index
    %c0_49 = arith.constant 0 : index
    %133 = vector.load %arg9[%c0_47, %c0_48, %c0_49] : memref<1x8x32xbf16, #tpu.memory_space<vmem>>, vector<1x8x32xbf16>
    %134 = vector.shape_cast %133 : vector<1x8x32xbf16> to vector<8x32xbf16>
    %135 = vector.shape_cast %132 : vector<8x32xbf16> to vector<1x8x32xbf16>
    tpu.vector_store %arg9[%c0_47, %c0_48, %c0_49], %135 {strides = array<i32>} : memref<1x8x32xbf16, #tpu.memory_space<vmem>>, vector<1x8x32xbf16>,
    return
  }
  func.func @transform_0(%arg0: i32) -> (i32, i32, i32) {
    %c0_i32 = arith.constant 0 : i32
    %c0_i32_0 = arith.constant 0 : i32
    %c0_i32_1 = arith.constant 0 : i32
    return %arg0, %c0_i32, %c0_i32_0 : i32, i32, i32
  }
  func.func @transform_1(%arg0: i32) -> (i32, i32, i32) {
    %c0_i32 = arith.constant 0 : i32
    %c0_i32_0 = arith.constant 0 : i32
    %c0_i32_1 = arith.constant 0 : i32
    return %arg0, %c0_i32, %c0_i32_0 : i32, i32, i32
  }
  func.func @transform_2(%arg0: i32) -> (i32, i32) {
    %c0_i32 = arith.constant 0 : i32
    %c0_i32_0 = arith.constant 0 : i32
    %c0_i32_1 = arith.constant 0 : i32
    return %c0_i32, %c0_i32_0 : i32, i32
  }
  func.func @transform_3(%arg0: i32) -> (i32, i32) {
    %c0_i32 = arith.constant 0 : i32
    %c0_i32_0 = arith.constant 0 : i32
    %c0_i32_1 = arith.constant 0 : i32
    return %c0_i32, %c0_i32_0 : i32, i32
  }
  func.func @transform_4(%arg0: i32) -> (i32, i32) {
    %c0_i32 = arith.constant 0 : i32
    %c0_i32_0 = arith.constant 0 : i32
    %c0_i32_1 = arith.constant 0 : i32
    return %c0_i32, %c0_i32_0 : i32, i32
  }
  func.func @transform_5(%arg0: i32) -> (i32, i32) {
    %c0_i32 = arith.constant 0 : i32
    %c0_i32_0 = arith.constant 0 : i32
    %c0_i32_1 = arith.constant 0 : i32
    return %c0_i32, %c0_i32_0 : i32, i32
  }
  func.func @transform_6(%arg0: i32) -> (i32, i32) {
    %c0_i32 = arith.constant 0 : i32
    %c0_i32_0 = arith.constant 0 : i32
    %c0_i32_1 = arith.constant 0 : i32
    return %c0_i32, %c0_i32_0 : i32, i32
  }
  func.func @transform_7(%arg0: i32) -> (i32, i32) {
    %c0_i32 = arith.constant 0 : i32
    %c0_i32_0 = arith.constant 0 : i32
    %c0_i32_1 = arith.constant 0 : i32
    return %c0_i32, %c0_i32_0 : i32, i32
  }
  func.func @transform_8(%arg0: i32) -> (i32, i32, i32) {
    %c0_i32 = arith.constant 0 : i32
    %c0_i32_0 = arith.constant 0 : i32
    %c0_i32_1 = arith.constant 0 : i32
    return %arg0, %c0_i32, %c0_i32_0 : i32, i32, i32
  }
}

</mosaic_0001>

<llo_original>
// kernel: tpu_custom_call.1
$region0: #{tpu_custom_call.1}
  #allocation0 [shape = 'u32[]', space=smem, size = 0x4, offset = 0x4, fixed_abs, tag = 'smem constant byte address 0x4 - core index']
  #allocation1 [shape = 'u32[72,128]{1,0:T(1,128)}', space=vmem, size = 0x9000, scoped, tag = 'internal scratch']
  %s0 = inlined_call_operand.hbm [shape: bf16[2,8,32], index: 0, kind: input, shape index: {}]
  %s1 = inlined_call_operand.hbm [shape: bf16[2,8,8], index: 1, kind: input, shape index: {}]
  %s2 = inlined_call_operand.hbm [shape: bf16[32,96], index: 2, kind: input, shape index: {}]
  %s3 = inlined_call_operand.vmem [shape: f32[1,96], index: 3, kind: input, shape index: {}]
  %s4 = inlined_call_operand.hbm [shape: bf16[32,32], index: 4, kind: input, shape index: {}]
  %s5 = inlined_call_operand.vmem [shape: f32[1,32], index: 5, kind: input, shape index: {}]
  %s6 = inlined_call_operand.vmem [shape: f32[1,32], index: 6, kind: input, shape index: {}]
  %s7 = inlined_call_operand.vmem [shape: f32[1,32], index: 7, kind: input, shape index: {}]
  %s8 = inlined_call_operand.hbm [shape: bf16[2,8,32], index: 8, kind: output, shape index: {}]
  %s9 = sld [smem:[#allocation0]]
  $region81: #{tpu_custom_call.1} parent=0
    _
  %s11 = ssub.s32 1, %s9
  %s12 = scalar_select 0, %s11, %s9
  $region1: #{tpu_custom_call.1} parent=0
    #allocation2 [shape = 'u8[4096]{0}', space=vmem, size = 0x1000, scoped, tag = 'input window, operand 0']
    #allocation3 [shape = 's32[2]{0}', space=sflag, size = 0x8, scoped, tag = 'scoped memory for tpu_custom_call.1']
    #allocation4 [shape = 's32[2]{0}', space=sflag, size = 0x8, scoped, tag = 'scoped memory for tpu_custom_call.1']
    #allocation5 [shape = 'u8[4096]{0}', space=vmem, size = 0x1000, scoped, tag = 'input window, operand 1']
    #allocation6 [shape = 's32[2]{0}', space=sflag, size = 0x8, scoped, tag = 'scoped memory for tpu_custom_call.1']
    #allocation7 [shape = 'u8[8192]{0}', space=vmem, size = 0x2000, scoped, tag = 'input window, operand 2, single buffered']
    #allocation8 [shape = 'u8[8192]{0}', space=vmem, size = 0x2000, scoped, tag = 'input window, operand 4, single buffered']
    #allocation9 [shape = 's32[1]{0}', space=sflag, size = 0x4, scoped, tag = 'scoped memory for tpu_custom_call.1']
    #allocation10 [shape = 'u8[4096]{0}', space=vmem, size = 0x1000, scoped, tag = 'output window, operand 0']
    %13 = vsyncpa [#allocation3], 0
    %s14 = scalar_lea.sflag [#allocation3], 1
    %15 = vsyncpa %s14, 0
    %16 = vsyncpa [#allocation6], 0
    %s17 = scalar_lea.sflag [#allocation6], 1
    %18 = vsyncpa %s17, 0
    %19 = vsyncpa [#allocation9], 0
    %20 = vsyncpa [#allocation4], 0
    %s21 = scalar_lea.sflag [#allocation4], 1
    %22 = vsyncpa %s21, 0
    loop: start=0, step=1, limit=4
    $region2: #{tpu_custom_call.1} parent=1 // loop_pre_header
      _
    $region3: #{tpu_custom_call.1} parent=1 // loop_header
      %s24 = sphi 0, %s28
      %p25 = scmp.ge.s32.totalorder %s24, 4
      %s34 = sphi 0, %s36
      %s37 = sphi 0, %s34
      %s38 = sphi 0, %s37
      %s54 = sphi 0, %s38
      %s60 = sphi 0, %s62
      %s63 = sphi 0, %s60
      %s64 = sphi 0, %s63
      %s80 = sphi 0, %s64
      %s84 = sphi 0, %s84
      %s86 = sphi 0, %s84
      %s87 = sphi 0, %s86
      %s101 = sphi 0, %s87
      %s105 = sphi 0, %s105
      %s107 = sphi 0, %s105
      %s108 = sphi 0, %s107
      %s122 = sphi 0, %s108
      %s126 = sphi 0, %s126
      %s128 = sphi 0, %s126
      %s129 = sphi 0, %s128
      %s143 = sphi 0, %s129
      %s147 = sphi 0, %s147
      %s149 = sphi 0, %s147
      %s150 = sphi 0, %s149
      %s164 = sphi 0, %s150
      %s168 = sphi 0, %s168
      %s170 = sphi 0, %s168
      %s171 = sphi 0, %s170
      %s185 = sphi 0, %s171
      %s189 = sphi 0, %s189
      %s191 = sphi 0, %s189
      %s192 = sphi 0, %s191
      %s206 = sphi 0, %s192
      %s212 = sphi 0, %s214
      %s215 = sphi 0, %s212
      %s216 = sphi 0, %s215
      %s232 = sphi 0, %s216
    $region4: #{tpu_custom_call.1} parent=1 // loop_header_branch
      %27 = sbr.rel (%p25) target = $region8
    $region5: #{tpu_custom_call.1} parent=1 // loop_body
      %s29 = ssub.s32 %s24, 1
      %s30 = ssub.s32 %s24, 2
      %s31 = sadd.s32 %s24, 1
      %s32 = ssub.s32 %s24, %s31
      %p33 = scmp.eq.s32.totalorder %s32, 0
      %s35 = sadd.s32 %s34, 1
      %s36 = scalar_select %p33, %s34, %s35
      %p39 = pneg %p33
      %p40 = scmp.eq.s32.totalorder %s24, 1
      %p41 = por %p39, %p40
      %p42 = scmp.ne.s32.totalorder %s34, %s37
      %p43 = scmp.eq.s32.totalorder %s24, 0
      %p44 = por %p42, %p43
      %p45 = scmp.ne.s32.totalorder %s34, %s37
      %p46 = scmp.eq.s32.totalorder %s29, 1
      %p47 = por %p45, %p46
      %p48 = scmp.ne.s32.totalorder %s37, %s38
      %p49 = scmp.eq.s32.totalorder %s29, 0
      %p50 = por %p48, %p49
      %p51 = scmp.ne.s32.totalorder %s37, %s38
      %p52 = scmp.eq.s32.totalorder %s30, 1
      %p53 = por %p51, %p52
      %p55 = scmp.ne.s32.totalorder %s38, %s54
      %p56 = scmp.eq.s32.totalorder %s30, 0
      %p57 = por %p55, %p56
      %s58 = ssub.s32 %s24, %s31
      %p59 = scmp.eq.s32.totalorder %s58, 0
      %s61 = sadd.s32 %s60, 1
      %s62 = scalar_select %p59, %s60, %s61
      %p65 = pneg %p59
      %p66 = scmp.eq.s32.totalorder %s24, 1
      %p67 = por %p65, %p66
      %p68 = scmp.ne.s32.totalorder %s60, %s63
      %p69 = scmp.eq.s32.totalorder %s24, 0
      %p70 = por %p68, %p69
      %p71 = scmp.ne.s32.totalorder %s60, %s63
      %p72 = scmp.eq.s32.totalorder %s29, 1
      %p73 = por %p71, %p72
      %p74 = scmp.ne.s32.totalorder %s63, %s64
      %p75 = scmp.eq.s32.totalorder %s29, 0
      %p76 = por %p74, %p75
      %p77 = scmp.ne.s32.totalorder %s63, %s64
      %p78 = scmp.eq.s32.totalorder %s30, 1
      %p79 = por %p77, %p78
      %p81 = scmp.ne.s32.totalorder %s64, %s80
      %p82 = scmp.eq.s32.totalorder %s30, 0
      %p83 = por %p81, %p82
      %s85 = sadd.s32 %s84, 1
      %p88 = scmp.eq.s32.totalorder %s24, 1
      %p89 = scmp.ne.s32.totalorder %s84, %s86
      %p90 = scmp.eq.s32.totalorder %s24, 0
      %p91 = por %p89, %p90
      %p92 = scmp.ne.s32.totalorder %s84, %s86
      %p93 = scmp.eq.s32.totalorder %s29, 1
      %p94 = por %p92, %p93
      %p95 = scmp.ne.s32.totalorder %s86, %s87
      %p96 = scmp.eq.s32.totalorder %s29, 0
      %p97 = por %p95, %p96
      %p98 = scmp.ne.s32.totalorder %s86, %s87
      %p99 = scmp.eq.s32.totalorder %s30, 1
      %p100 = por %p98, %p99
      %p102 = scmp.ne.s32.totalorder %s87, %s101
      %p103 = scmp.eq.s32.totalorder %s30, 0
      %p104 = por %p102, %p103
      %s106 = sadd.s32 %s105, 1
      %p109 = scmp.eq.s32.totalorder %s24, 1
      %p110 = scmp.ne.s32.totalorder %s105, %s107
      %p111 = scmp.eq.s32.totalorder %s24, 0
      %p112 = por %p110, %p111
      %p113 = scmp.ne.s32.totalorder %s105, %s107
      %p114 = scmp.eq.s32.totalorder %s29, 1
      %p115 = por %p113, %p114
      %p116 = scmp.ne.s32.totalorder %s107, %s108
      %p117 = scmp.eq.s32.totalorder %s29, 0
      %p118 = por %p116, %p117
      %p119 = scmp.ne.s32.totalorder %s107, %s108
      %p120 = scmp.eq.s32.totalorder %s30, 1
      %p121 = por %p119, %p120
      %p123 = scmp.ne.s32.totalorder %s108, %s122
      %p124 = scmp.eq.s32.totalorder %s30, 0
      %p125 = por %p123, %p124
      %s127 = sadd.s32 %s126, 1
      %p130 = scmp.eq.s32.totalorder %s24, 1
      %p131 = scmp.ne.s32.totalorder %s126, %s128
      %p132 = scmp.eq.s32.totalorder %s24, 0
      %p133 = por %p131, %p132
      %p134 = scmp.ne.s32.totalorder %s126, %s128
      %p135 = scmp.eq.s32.totalorder %s29, 1
      %p136 = por %p134, %p135
      %p137 = scmp.ne.s32.totalorder %s128, %s129
      %p138 = scmp.eq.s32.totalorder %s29, 0
      %p139 = por %p137, %p138
      %p140 = scmp.ne.s32.totalorder %s128, %s129
      %p141 = scmp.eq.s32.totalorder %s30, 1
      %p142 = por %p140, %p141
      %p144 = scmp.ne.s32.totalorder %s129, %s143
      %p145 = scmp.eq.s32.totalorder %s30, 0
      %p146 = por %p144, %p145
      %s148 = sadd.s32 %s147, 1
      %p151 = scmp.eq.s32.totalorder %s24, 1
      %p152 = scmp.ne.s32.totalorder %s147, %s149
      %p153 = scmp.eq.s32.totalorder %s24, 0
      %p154 = por %p152, %p153
      %p155 = scmp.ne.s32.totalorder %s147, %s149
      %p156 = scmp.eq.s32.totalorder %s29, 1
      %p157 = por %p155, %p156
      %p158 = scmp.ne.s32.totalorder %s149, %s150
      %p159 = scmp.eq.s32.totalorder %s29, 0
      %p160 = por %p158, %p159
      %p161 = scmp.ne.s32.totalorder %s149, %s150
      %p162 = scmp.eq.s32.totalorder %s30, 1
      %p163 = por %p161, %p162
      %p165 = scmp.ne.s32.totalorder %s150, %s164
      %p166 = scmp.eq.s32.totalorder %s30, 0
      %p167 = por %p165, %p166
      %s169 = sadd.s32 %s168, 1
      %p172 = scmp.eq.s32.totalorder %s24, 1
      %p173 = scmp.ne.s32.totalorder %s168, %s170
      %p174 = scmp.eq.s32.totalorder %s24, 0
      %p175 = por %p173, %p174
      %p176 = scmp.ne.s32.totalorder %s168, %s170
      %p177 = scmp.eq.s32.totalorder %s29, 1
      %p178 = por %p176, %p177
      %p179 = scmp.ne.s32.totalorder %s170, %s171
      %p180 = scmp.eq.s32.totalorder %s29, 0
      %p181 = por %p179, %p180
      %p182 = scmp.ne.s32.totalorder %s170, %s171
      %p183 = scmp.eq.s32.totalorder %s30, 1
      %p184 = por %p182, %p183
      %p186 = scmp.ne.s32.totalorder %s171, %s185
      %p187 = scmp.eq.s32.totalorder %s30, 0
      %p188 = por %p186, %p187
      %s190 = sadd.s32 %s189, 1
      %p193 = scmp.eq.s32.totalorder %s24, 1
      %p194 = scmp.ne.s32.totalorder %s189, %s191
      %p195 = scmp.eq.s32.totalorder %s24, 0
      %p196 = por %p194, %p195
      %p197 = scmp.ne.s32.totalorder %s189, %s191
      %p198 = scmp.eq.s32.totalorder %s29, 1
      %p199 = por %p197, %p198
      %p200 = scmp.ne.s32.totalorder %s191, %s192
      %p201 = scmp.eq.s32.totalorder %s29, 0
      %p202 = por %p200, %p201
      %p203 = scmp.ne.s32.totalorder %s191, %s192
      %p204 = scmp.eq.s32.totalorder %s30, 1
      %p205 = por %p203, %p204
      %p207 = scmp.ne.s32.totalorder %s192, %s206
      %p208 = scmp.eq.s32.totalorder %s30, 0
      %p209 = por %p207, %p208
      %s210 = ssub.s32 %s24, %s31
      %p211 = scmp.eq.s32.totalorder %s210, 0
      %s213 = sadd.s32 %s212, 1
      %s214 = scalar_select %p211, %s212, %s213
      %p217 = pneg %p211
      %p218 = scmp.eq.s32.totalorder %s24, 1
      %p219 = por %p217, %p218
      %p220 = scmp.ne.s32.totalorder %s212, %s215
      %p221 = scmp.eq.s32.totalorder %s24, 0
      %p222 = por %p220, %p221
      %p223 = scmp.ne.s32.totalorder %s212, %s215
      %p224 = scmp.eq.s32.totalorder %s29, 1
      %p225 = por %p223, %p224
      %p226 = scmp.ne.s32.totalorder %s215, %s216
      %p227 = scmp.eq.s32.totalorder %s29, 0
      %p228 = por %p226, %p227
      %p229 = scmp.ne.s32.totalorder %s215, %s216
      %p230 = scmp.eq.s32.totalorder %s30, 1
      %p231 = por %p229, %p230
      %p233 = scmp.ne.s32.totalorder %s216, %s232
      %p234 = scmp.eq.s32.totalorder %s30, 0
      %p235 = por %p233, %p234
      %p236 = scmp.le.s32.totalorder 1, %s24
      %p237 = scmp.lt.s32.totalorder %s24, 3
      %p238 = pnand %p236, %p237
      %p239 = pneg %p238
      // Predicated region
      $region9: #{tpu_custom_call.1} parent=5 // pred_check
        _
      $region10: #{tpu_custom_call.1} parent=5 // pred_check_branch
        %241 = sbr.rel (%p238) target = $region12
      $region11: #{tpu_custom_call.1} parent=5 // pred_region
        %s242 = ssub.s32 %s24, 1
        // Predicated region
        $region13: #{tpu_custom_call.1} parent=11 // pred_check
          %p243 = pneg %p97
        $region14: #{tpu_custom_call.1} parent=11 // pred_check_branch
          %245 = sbr.rel (%p243) target = $region16
        $region15: #{tpu_custom_call.1} parent=11 // pred_region
          %247 = vsyncadd [#allocation6], 0
          %s248 = sshll.u32 %s2, 4
          %s249 = int_to_ptr.hbm [resolvable:$true] %s248
          %s250 = sshll.u32 [#allocation7], 4
          %s251 = int_to_ptr.vmem [resolvable:$true] %s250
          %256 = dma.hbm_to_vmem [thread:$0]  %s249, 256, %s251, [#allocation6], 64, 64, 4
        $region16: #{tpu_custom_call.1} parent=11 // pred_fallthru
          _
        // Predicated region
        $region17: #{tpu_custom_call.1} parent=11 // pred_check
          %p257 = pneg %p118
        $region18: #{tpu_custom_call.1} parent=11 // pred_check_branch
          %259 = sbr.rel (%p257) target = $region20
        $region19: #{tpu_custom_call.1} parent=11 // pred_region
          _
        $region20: #{tpu_custom_call.1} parent=11 // pred_fallthru
          _
        // Predicated region
        $region21: #{tpu_custom_call.1} parent=11 // pred_check
          %p260 = pneg %p139
        $region22: #{tpu_custom_call.1} parent=11 // pred_check_branch
          %262 = sbr.rel (%p260) target = $region24
        $region23: #{tpu_custom_call.1} parent=11 // pred_region
          %264 = vsyncadd [#allocation9], 0
          %s265 = sshll.u32 %s4, 4
          %s266 = int_to_ptr.hbm [resolvable:$true] %s265
          %s267 = sshll.u32 [#allocation8], 4
          %s268 = int_to_ptr.vmem [resolvable:$true] %s267
          %273 = dma.hbm_to_vmem [thread:$0]  %s266, 256, %s268, [#allocation9], 64, 64, 4
        $region24: #{tpu_custom_call.1} parent=11 // pred_fallthru
          _
        // Predicated region
        $region25: #{tpu_custom_call.1} parent=11 // pred_check
          %p274 = pneg %p160
        $region26: #{tpu_custom_call.1} parent=11 // pred_check_branch
          %276 = sbr.rel (%p274) target = $region28
        $region27: #{tpu_custom_call.1} parent=11 // pred_region
          _
        $region28: #{tpu_custom_call.1} parent=11 // pred_fallthru
          _
        // Predicated region
        $region29: #{tpu_custom_call.1} parent=11 // pred_check
          %p277 = pneg %p181
        $region30: #{tpu_custom_call.1} parent=11 // pred_check_branch
          %279 = sbr.rel (%p277) target = $region32
        $region31: #{tpu_custom_call.1} parent=11 // pred_region
          _
        $region32: #{tpu_custom_call.1} parent=11 // pred_fallthru
          _
        // Predicated region
        $region33: #{tpu_custom_call.1} parent=11 // pred_check
          %p280 = pneg %p202
        $region34: #{tpu_custom_call.1} parent=11 // pred_check_branch
          %282 = sbr.rel (%p280) target = $region36
        $region35: #{tpu_custom_call.1} parent=11 // pred_region
          _
        $region36: #{tpu_custom_call.1} parent=11 // pred_fallthru
          _
      $region12: #{tpu_custom_call.1} parent=5 // pred_fallthru
        _
      %p283 = scmp.lt.s32.totalorder %s24, 2
      // Predicated region
      $region37: #{tpu_custom_call.1} parent=5 // pred_check
        %p284 = pneg %p283
      $region38: #{tpu_custom_call.1} parent=5 // pred_check_branch
        %286 = sbr.rel (%p284) target = $region40
      $region39: #{tpu_custom_call.1} parent=5 // pred_region
        // Predicated region
        $region41: #{tpu_custom_call.1} parent=39 // pred_check
          %p287 = pneg %p44
        $region42: #{tpu_custom_call.1} parent=39 // pred_check_branch
          %289 = sbr.rel (%p287) target = $region44
        $region43: #{tpu_custom_call.1} parent=39 // pred_region
          %s290 = sand.u32 %s34, 1
          %s291 = scalar_lea.sflag [#allocation3], %s290
          %s292 = sand.u32 %s34, 1
          %s293 = smul.addr %s292, 4
          %s294 = scalar_lea.vmem [#allocation2], %s293
          %296 = vsyncadd %s291, 0
          %s297 = smul.addr %s24, 4
          %s298 = scalar_lea.hbm %s0, %s297
          %s300 = sshll.u32 %s298, 4
          %s301 = int_to_ptr.hbm [resolvable:$true] %s300
          %s302 = sshll.u32 %s294, 4
          %s303 = int_to_ptr.vmem [resolvable:$true] %s302
          %305 = dma.hbm_to_vmem [thread:$0]  %s301, 64, %s303, %s291
        $region44: #{tpu_custom_call.1} parent=39 // pred_fallthru
          _
        // Predicated region
        $region45: #{tpu_custom_call.1} parent=39 // pred_check
          %p306 = pneg %p70
        $region46: #{tpu_custom_call.1} parent=39 // pred_check_branch
          %308 = sbr.rel (%p306) target = $region48
        $region47: #{tpu_custom_call.1} parent=39 // pred_region
          %s309 = sand.u32 %s24, 1
          %s310 = scalar_lea.sflag [#allocation6], %s309
          %s311 = sand.u32 %s60, 1
          %s312 = smul.addr %s311, 4
          %s313 = scalar_lea.vmem [#allocation5], %s312
          %315 = vsyncadd %s310, 0
          %s316 = smul.addr %s24, 4
          %s317 = scalar_lea.hbm %s1, %s316
          %s319 = sshll.u32 %s317, 4
          %s320 = int_to_ptr.hbm [resolvable:$true] %s319
          %s321 = sshll.u32 %s313, 4
          %s322 = int_to_ptr.vmem [resolvable:$true] %s321
          %324 = dma.hbm_to_vmem [thread:$0]  %s320, 64, %s322, %s310
        $region48: #{tpu_custom_call.1} parent=39 // pred_fallthru
          _
      $region40: #{tpu_custom_call.1} parent=5 // pred_fallthru
        _
      %p325 = scmp.le.s32.totalorder 1, %s24
      %p326 = scmp.lt.s32.totalorder %s24, 3
      %p327 = pnand %p325, %p326
      %p328 = pneg %p327
      // Predicated region
      $region49: #{tpu_custom_call.1} parent=5 // pred_check
        _
      $region50: #{tpu_custom_call.1} parent=5 // pred_check_branch
        %330 = sbr.rel (%p327) target = $region52
      $region51: #{tpu_custom_call.1} parent=5 // pred_region
        %s331 = ssub.s32 %s24, 1
        %s332 = sand.u32 %s37, 1
        %s333 = scalar_lea.sflag [#allocation3], %s332
        %s334 = sand.u32 %s37, 1
        %s335 = smul.addr %s334, 4
        %s336 = scalar_lea.vmem [#allocation2], %s335
        // Predicated region
        $region53: #{tpu_custom_call.1} parent=51 // pred_check
          %p337 = pneg %p50
        $region54: #{tpu_custom_call.1} parent=51 // pred_check_branch
          %339 = sbr.rel (%p337) target = $region56
        $region55: #{tpu_custom_call.1} parent=51 // pred_region
          %341 = dma.done %s333, 64
        $region56: #{tpu_custom_call.1} parent=51 // pred_fallthru
          _
        %s342 = sand.u32 %s29, 1
        %s343 = scalar_lea.sflag [#allocation6], %s342
        %s344 = sand.u32 %s63, 1
        %s345 = smul.addr %s344, 4
        %s346 = scalar_lea.vmem [#allocation5], %s345
        // Predicated region
        $region57: #{tpu_custom_call.1} parent=51 // pred_check
          %p347 = pneg %p76
        $region58: #{tpu_custom_call.1} parent=51 // pred_check_branch
          %349 = sbr.rel (%p347) target = $region60
        $region59: #{tpu_custom_call.1} parent=51 // pred_region
          %351 = dma.done %s343, 64
        $region60: #{tpu_custom_call.1} parent=51 // pred_fallthru
          _
        // Predicated region
        $region61: #{tpu_custom_call.1} parent=51 // pred_check
          %p352 = pneg %p97
        $region62: #{tpu_custom_call.1} parent=51 // pred_check_branch
          %354 = sbr.rel (%p352) target = $region64
        $region63: #{tpu_custom_call.1} parent=51 // pred_region
          %356 = dma.done [#allocation6], 256
        $region64: #{tpu_custom_call.1} parent=51 // pred_fallthru
          _
        // Predicated region
        $region65: #{tpu_custom_call.1} parent=51 // pred_check
          %p357 = pneg %p139
        $region66: #{tpu_custom_call.1} parent=51 // pred_check_branch
          %359 = sbr.rel (%p357) target = $region68
        $region67: #{tpu_custom_call.1} parent=51 // pred_region
          %361 = dma.done [#allocation9], 256
        $region68: #{tpu_custom_call.1} parent=51 // pred_fallthru
          _
        %s362 = sand.u32 %s37, 1
        %s363 = scalar_lea.sflag [#allocation3], %s362
        %s364 = sand.u32 %s37, 1
        %s365 = smul.addr %s364, 4
        %s366 = scalar_lea.vmem [#allocation2], %s365
        %p367 = pneg %p50
        %p368 = pneg %p47
        %s369 = sand.u32 %s29, 1
        %s370 = scalar_lea.sflag [#allocation6], %s369
        %s371 = sand.u32 %s63, 1
        %s372 = smul.addr %s371, 4
        %s373 = scalar_lea.vmem [#allocation5], %s372
        %p374 = pneg %p76
        %p375 = pneg %p73
        %p376 = pneg %p97
        %p377 = pneg %p94
        %p378 = pneg %p118
        %p379 = pneg %p115
        %p380 = pneg %p139
        %p381 = pneg %p136
        %p382 = pneg %p160
        %p383 = pneg %p157
        %p384 = pneg %p181
        %p385 = pneg %p178
        %p386 = pneg %p202
        %p387 = pneg %p199
        %p388 = pneg %p228
        %p389 = pneg %p225
        %s390 = sand.u32 %s215, 1
        %s391 = scalar_lea.sflag [#allocation4], %s390
        %s392 = sand.u32 %s215, 1
        %s393 = smul.addr %s392, 4
        %s394 = scalar_lea.vmem [#allocation10], %s393
        %v396 = vld [vmem:[%s336] sm:$0xf]
        %v397 = vld [vmem:[%s346] sm:$0xf]
        %v398 = vunpack.c.l.bf16 %v397
        %v399 = vld [vmem:[#allocation7] sm:$0xf]
        %v400 = vld [vmem:[#allocation7 + $0x4] sm:$0xf]
        %v401 = vld [vmem:[#allocation7 + $0x8] sm:$0xf]
        %v402 = vld [vmem:[#allocation7 + $0xc] sm:$0xf]
        %v403 = vld [vmem:[%s3] sm:$0x1]
        %v405 = vperm.slane %v403, 0
        %v411 = vunpack.c.l.b16 %v399
        %v412 = vunpack.c.l.b16 %v400
        %v413 = vunpack.c.l.b16 %v401
        %v414 = vunpack.c.l.b16 %v402
        %v415 = vpack.c.b16 %v412, %v411
        %v416 = vpack.c.b16 %v414, %v413
        %vm419 = vcmask 261120
        %v421 = vsel %vm419, %v396, 0
        %423 = vmatpush.bf16.msra.mxu0 0
        %424 = vmatpush.bf16.msra.mxu0 0
        %425 = vmatpush.bf16.msra.mxu0 0
        %426 = vmatpush.bf16.msra.mxu0 0
        %427 = vmatpush.bf16.msra.mxu0 0
        %428 = vmatpush.bf16.msra.mxu0 0
        %429 = vmatpush.bf16.msra.mxu0 %v416
        %430 = vmatpush.bf16.msra.mxu0 %v415
        %431 = vmatmul.bf16.gmra.mxu0 %v421
        %v432 = vpop.f32.mrf.mxu0
        %v433 = vadd.f32 %v405, %v432
        %v434 = vpop.f32.mrf.mxu0
        %435 = vdwg.mxu0
        %v436 = vmul.f32 %v433, 0.35355338
        %v437 = vunpack.c.l.bf16 %v396
        %v438 = vpack.c.bf16 %v436, %v436
        %v439 = vpack.c.bf16 %v433, %v433
        %v441 = vunpack.c.l.b16 %v439
        %v442 = vpack.c.b16 %v441, %v441
        %443 = vrot.lane.b32.xlu0 %v442, 96
        %v444 = vpop.permute.xlu0 %443
        %vm445 = vcmask 64512
        %v447 = vsel %vm445, %v438, 0
        %v450 = vsel %vm445, %v444, 0
        %452 = vmatpush.bf16.xpose.msra.mxu0 0
        %453 = vmatpush.bf16.xpose.msra.mxu0 0
        %454 = vmatpush.bf16.xpose.msra.mxu0 0
        %455 = vmatpush.bf16.xpose.msra.mxu0 0
        %456 = vmatpush.bf16.xpose.msra.mxu0 0
        %457 = vmatpush.bf16.xpose.msra.mxu0 0
        %458 = vmatpush.bf16.xpose.msra.mxu0 0
        %459 = vmatpush.bf16.xpose.msra.mxu0 %v450
        %460 = vmatmul.bf16.gmra.mxu0 %v447
        %v461 = vpop.f32.mrf.mxu0
        %v462 = vadd.f32 %v398, %v461
        %v463 = vpop.f32.mrf.mxu0
        %464 = vdwg.mxu0
        %v465 = vsel %vm445, %v462, -inf
        %466 = vmax.xlane.f32.xlu0 %v465
        %v467 = vpop.xlane.xlu0 %466
        %v468 = vsub.f32 %v462, %v467
        %v469 = vmul.f32 %v468, 1.442695
        %v470 = vpow.pop %v469
        %v471 = vsel %vm445, %v470, 0.0
        %472 = vadd.xlane.f32.xlu0 %v471
        %v473 = vpop.xlane.xlu0 %472
        %v474 = vrcp.pop %v473
        %v475 = vmul.f32 %v470, %v474
        %v476 = vpack.c.bf16 %v475, %v475
        %477 = vrot.lane.b32.xlu0 %v442, 64
        %v478 = vpop.permute.xlu0 %477
        %v480 = vsel %vm445, %v476, 0
        %vm482 = vcmask 1043456
        %v484 = vsel %vm482, %v478, 0
        %486 = vmatpush.bf16.msra.mxu0 0
        %487 = vmatpush.bf16.msra.mxu0 0
        %488 = vmatpush.bf16.msra.mxu0 0
        %489 = vmatpush.bf16.msra.mxu0 0
        %490 = vmatpush.bf16.msra.mxu0 0
        %491 = vmatpush.bf16.msra.mxu0 0
        %492 = vmatpush.bf16.msra.mxu0 0
        %493 = vmatpush.bf16.msra.mxu0 %v484
        %494 = vmatmul.bf16.gmra.mxu0 %v480
        %v495 = vpop.f32.mrf.mxu0
        %v496 = vadd.f32 0.0, %v495
        %v497 = vpop.f32.mrf.mxu0
        %498 = vdwg.mxu0
        %v499 = vpack.c.bf16 %v496, %v496
        %v500 = vld [vmem:[#allocation8] sm:$0xf]
        %v502 = vunpack.c.l.b16 %v438
        %v503 = vpack.c.b16 %v502, %v502
        %504 = vrot.lane.b32.xlu0 %v503, 120
        %v505 = vpop.permute.xlu0 %504
        %506 = vrot.lane.b32.xlu0 %v442, 88
        %v507 = vpop.permute.xlu0 %506
        %v509 = vsel %vm445, %v505, 0
        %v512 = vsel %vm445, %v507, 0
        %514 = vmatpush.bf16.xpose.msra.mxu0 0
        %515 = vmatpush.bf16.xpose.msra.mxu0 0
        %516 = vmatpush.bf16.xpose.msra.mxu0 0
        %517 = vmatpush.bf16.xpose.msra.mxu0 0
        %518 = vmatpush.bf16.xpose.msra.mxu0 0
        %519 = vmatpush.bf16.xpose.msra.mxu0 0
        %520 = vmatpush.bf16.xpose.msra.mxu0 0
        %521 = vmatpush.bf16.xpose.msra.mxu0 %v512
        %522 = vmatmul.bf16.gmra.mxu0 %v509
        %v523 = vpop.f32.mrf.mxu0
        %v524 = vadd.f32 %v398, %v523
        %v525 = vpop.f32.mrf.mxu0
        %526 = vdwg.mxu0
        %v527 = vsel %vm445, %v524, -inf
        %528 = vmax.xlane.f32.xlu0 %v527
        %v529 = vpop.xlane.xlu0 %528
        %v530 = vsub.f32 %v524, %v529
        %v531 = vmul.f32 %v530, 1.442695
        %v532 = vpow.pop %v531
        %v533 = vsel %vm445, %v532, 0.0
        %534 = vadd.xlane.f32.xlu0 %v533
        %v535 = vpop.xlane.xlu0 %534
        %v536 = vrcp.pop %v535
        %v537 = vmul.f32 %v532, %v536
        %v538 = vpack.c.bf16 %v537, %v537
        %539 = vrot.lane.b32.xlu0 %v442, 56
        %v540 = vpop.permute.xlu0 %539
        %v542 = vsel %vm445, %v538, 0
        %v545 = vsel %vm482, %v540, 0
        %547 = vmatpush.bf16.msra.mxu0 0
        %548 = vmatpush.bf16.msra.mxu0 0
        %549 = vmatpush.bf16.msra.mxu0 0
        %550 = vmatpush.bf16.msra.mxu0 0
        %551 = vmatpush.bf16.msra.mxu0 0
        %552 = vmatpush.bf16.msra.mxu0 0
        %553 = vmatpush.bf16.msra.mxu0 0
        %554 = vmatpush.bf16.msra.mxu0 %v545
        %555 = vmatmul.bf16.gmra.mxu0 %v542
        %v556 = vpop.f32.mrf.mxu0
        %v557 = vadd.f32 0.0, %v556
        %v558 = vpop.f32.mrf.mxu0
        %559 = vdwg.mxu0
        %v560 = vpack.c.bf16 %v557, %v557
        %v561 = vld [vmem:[#allocation8 + $0x4] sm:$0xf]
        %v563 = vsel %vm445, %v560, 0
        %v566 = vsel %vm482, %v561, 0
        %568 = vmatpush.bf16.msra.mxu0 0
        %569 = vmatpush.bf16.msra.mxu0 0
        %570 = vmatpush.bf16.msra.mxu0 0
        %571 = vmatpush.bf16.msra.mxu0 0
        %572 = vmatpush.bf16.msra.mxu0 0
        %573 = vmatpush.bf16.msra.mxu0 0
        %574 = vmatpush.bf16.msra.mxu0 0
        %575 = vmatpush.bf16.msra.mxu0 %v566
        %576 = vmatmul.bf16.gmra.mxu0 %v563
        %v577 = vpop.f32.mrf.mxu0
        %v578 = vadd.f32 0.0, %v577
        %v579 = vpop.f32.mrf.mxu0
        %580 = vdwg.mxu0
        %v582 = vsel %vm445, %v499, 0
        %v585 = vsel %vm482, %v500, 0
        %587 = vmatpush.bf16.msra.mxu0 0
        %588 = vmatpush.bf16.msra.mxu0 0
        %589 = vmatpush.bf16.msra.mxu0 0
        %590 = vmatpush.bf16.msra.mxu0 0
        %591 = vmatpush.bf16.msra.mxu0 0
        %592 = vmatpush.bf16.msra.mxu0 0
        %593 = vmatpush.bf16.msra.mxu0 0
        %594 = vmatpush.bf16.msra.mxu0 %v585
        %595 = vmatmul.bf16.gmra.mxu0 %v582
        %v596 = vpop.f32.mrf.mxu0
        %v597 = vadd.f32 %v578, %v596
        %v598 = vpop.f32.mrf.mxu0
        %599 = vdwg.mxu0
        %600 = vrot.lane.b32.xlu0 %v503, 112
        %v601 = vpop.permute.xlu0 %600
        %602 = vrot.lane.b32.xlu0 %v442, 80
        %v603 = vpop.permute.xlu0 %602
        %v605 = vsel %vm445, %v601, 0
        %v608 = vsel %vm445, %v603, 0
        %610 = vmatpush.bf16.xpose.msra.mxu0 0
        %611 = vmatpush.bf16.xpose.msra.mxu0 0
        %612 = vmatpush.bf16.xpose.msra.mxu0 0
        %613 = vmatpush.bf16.xpose.msra.mxu0 0
        %614 = vmatpush.bf16.xpose.msra.mxu0 0
        %615 = vmatpush.bf16.xpose.msra.mxu0 0
        %616 = vmatpush.bf16.xpose.msra.mxu0 0
        %617 = vmatpush.bf16.xpose.msra.mxu0 %v608
        %618 = vmatmul.bf16.gmra.mxu0 %v605
        %v619 = vpop.f32.mrf.mxu0
        %v620 = vadd.f32 %v398, %v619
        %v621 = vpop.f32.mrf.mxu0
        %622 = vdwg.mxu0
        %v623 = vsel %vm445, %v620, -inf
        %624 = vmax.xlane.f32.xlu0 %v623
        %v625 = vpop.xlane.xlu0 %624
        %v626 = vsub.f32 %v620, %v625
        %v627 = vmul.f32 %v626, 1.442695
        %v628 = vpow.pop %v627
        %v629 = vsel %vm445, %v628, 0.0
        %630 = vadd.xlane.f32.xlu0 %v629
        %v631 = vpop.xlane.xlu0 %630
        %v632 = vrcp.pop %v631
        %v633 = vmul.f32 %v628, %v632
        %v634 = vpack.c.bf16 %v633, %v633
        %635 = vrot.lane.b32.xlu0 %v442, 48
        %v636 = vpop.permute.xlu0 %635
        %v638 = vsel %vm445, %v634, 0
        %v641 = vsel %vm482, %v636, 0
        %643 = vmatpush.bf16.msra.mxu0 0
        %644 = vmatpush.bf16.msra.mxu0 0
        %645 = vmatpush.bf16.msra.mxu0 0
        %646 = vmatpush.bf16.msra.mxu0 0
        %647 = vmatpush.bf16.msra.mxu0 0
        %648 = vmatpush.bf16.msra.mxu0 0
        %649 = vmatpush.bf16.msra.mxu0 0
        %650 = vmatpush.bf16.msra.mxu0 %v641
        %651 = vmatmul.bf16.gmra.mxu0 %v638
        %v652 = vpop.f32.mrf.mxu0
        %v653 = vadd.f32 0.0, %v652
        %v654 = vpop.f32.mrf.mxu0
        %655 = vdwg.mxu0
        %v656 = vpack.c.bf16 %v653, %v653
        %v657 = vld [vmem:[#allocation8 + $0x8] sm:$0xf]
        %v659 = vsel %vm445, %v656, 0
        %v662 = vsel %vm482, %v657, 0
        %664 = vmatpush.bf16.msra.mxu0 0
        %665 = vmatpush.bf16.msra.mxu0 0
        %666 = vmatpush.bf16.msra.mxu0 0
        %667 = vmatpush.bf16.msra.mxu0 0
        %668 = vmatpush.bf16.msra.mxu0 0
        %669 = vmatpush.bf16.msra.mxu0 0
        %670 = vmatpush.bf16.msra.mxu0 0
        %671 = vmatpush.bf16.msra.mxu0 %v662
        %672 = vmatmul.bf16.gmra.mxu0 %v659
        %v673 = vpop.f32.mrf.mxu0
        %v674 = vadd.f32 0.0, %v673
        %v675 = vpop.f32.mrf.mxu0
        %676 = vdwg.mxu0
        %v677 = vadd.f32 %v597, %v674
        %678 = vrot.lane.b32.xlu0 %v503, 104
        %v679 = vpop.permute.xlu0 %678
        %680 = vrot.lane.b32.xlu0 %v442, 72
        %v681 = vpop.permute.xlu0 %680
        %v683 = vsel %vm445, %v679, 0
        %v686 = vsel %vm445, %v681, 0
        %688 = vmatpush.bf16.xpose.msra.mxu0 0
        %689 = vmatpush.bf16.xpose.msra.mxu0 0
        %690 = vmatpush.bf16.xpose.msra.mxu0 0
        %691 = vmatpush.bf16.xpose.msra.mxu0 0
        %692 = vmatpush.bf16.xpose.msra.mxu0 0
        %693 = vmatpush.bf16.xpose.msra.mxu0 0
        %694 = vmatpush.bf16.xpose.msra.mxu0 0
        %695 = vmatpush.bf16.xpose.msra.mxu0 %v686
        %696 = vmatmul.bf16.gmra.mxu0 %v683
        %v697 = vpop.f32.mrf.mxu0
        %v698 = vadd.f32 %v398, %v697
        %v699 = vpop.f32.mrf.mxu0
        %700 = vdwg.mxu0
        %v701 = vsel %vm445, %v698, -inf
        %702 = vmax.xlane.f32.xlu0 %v701
        %v703 = vpop.xlane.xlu0 %702
        %v704 = vsub.f32 %v698, %v703
        %v705 = vmul.f32 %v704, 1.442695
        %v706 = vpow.pop %v705
        %v707 = vsel %vm445, %v706, 0.0
        %708 = vadd.xlane.f32.xlu0 %v707
        %v709 = vpop.xlane.xlu0 %708
        %v710 = vrcp.pop %v709
        %v711 = vmul.f32 %v706, %v710
        %v712 = vpack.c.bf16 %v711, %v711
        %713 = vrot.lane.b32.xlu0 %v442, 40
        %v714 = vpop.permute.xlu0 %713
        %v716 = vsel %vm445, %v712, 0
        %v719 = vsel %vm482, %v714, 0
        %721 = vmatpush.bf16.msra.mxu0 0
        %722 = vmatpush.bf16.msra.mxu0 0
        %723 = vmatpush.bf16.msra.mxu0 0
        %724 = vmatpush.bf16.msra.mxu0 0
        %725 = vmatpush.bf16.msra.mxu0 0
        %726 = vmatpush.bf16.msra.mxu0 0
        %727 = vmatpush.bf16.msra.mxu0 0
        %728 = vmatpush.bf16.msra.mxu0 %v719
        %729 = vmatmul.bf16.gmra.mxu0 %v716
        %v730 = vpop.f32.mrf.mxu0
        %v731 = vadd.f32 0.0, %v730
        %v732 = vpop.f32.mrf.mxu0
        %733 = vdwg.mxu0
        %v734 = vpack.c.bf16 %v731, %v731
        %v735 = vld [vmem:[#allocation8 + $0xc] sm:$0xf]
        %v737 = vsel %vm445, %v734, 0
        %v740 = vsel %vm482, %v735, 0
        %742 = vmatpush.bf16.msra.mxu0 0
        %743 = vmatpush.bf16.msra.mxu0 0
        %744 = vmatpush.bf16.msra.mxu0 0
        %745 = vmatpush.bf16.msra.mxu0 0
        %746 = vmatpush.bf16.msra.mxu0 0
        %747 = vmatpush.bf16.msra.mxu0 0
        %748 = vmatpush.bf16.msra.mxu0 0
        %749 = vmatpush.bf16.msra.mxu0 %v740
        %750 = vmatmul.bf16.gmra.mxu0 %v737
        %v751 = vpop.f32.mrf.mxu0
        %v752 = vadd.f32 0.0, %v751
        %v753 = vpop.f32.mrf.mxu0
        %754 = vdwg.mxu0
        %v755 = vadd.f32 %v677, %v752
        %v756 = vld [vmem:[%s5] sm:$0x1]
        %v758 = vperm.slane %v756, 0
        %v760 = vadd.f32 %v755, %v758
        %v761 = vadd.f32 %v760, %v437
        %v762 = vsel %vm419, %v761, 0.0
        %763 = vadd.xlane.f32.xlu0 %v762
        %v764 = vpop.xlane.xlu0 %763
        %v765 = vrcp.pop 32.0
        %v766 = vmul.f32 32.0, %v765
        %v767 = vsub.f32 1.0, %v766
        %v768 = vmul.f32 %v765, %v767
        %v769 = vadd.f32 %v765, %v768
        %vm770 = vweird.f32 %v765
        %v771 = vsel %vm770, %v765, %v769
        %v772 = vmul.f32 %v764, %v771
        %v773 = vsub.f32 %v761, %v772
        %v774 = vmul.f32 %v773, %v773
        %v775 = vsel %vm419, %v774, 0.0
        %776 = vadd.xlane.f32.xlu0 %v775
        %v777 = vpop.xlane.xlu0 %776
        %v778 = vmul.f32 %v777, %v771
        %v779 = vadd.f32 %v778, 1e-05
        %v780 = vrsqrt.pop %v779
        %v781 = vmul.f32 %v780, %v779
        %v782 = vmul.f32 %v781, %v780
        %v783 = vmul.f32 0.5, %v782
        %v784 = vsub.f32 1.5, %v783
        %v785 = vmul.f32 %v780, %v784
        %vm786 = vweird.f32 %v779
        %vm787 = vweird.f32 %v780
        %vm788 = vmor %vm786, %vm787
        %v789 = vsel %vm788, %v780, %v785
        %v790 = vmul.f32 %v773, %v789
        %v791 = vld [vmem:[%s6] sm:$0x1]
        %v793 = vperm.slane %v791, 0
        %v795 = vmul.f32 %v790, %v793
        %v796 = vld [vmem:[%s7] sm:$0x1]
        %v798 = vperm.slane %v796, 0
        %v800 = vadd.f32 %v795, %v798
        %v801 = vpack.c.bf16 %v800, %v800
        %vm802 = vcmask 257024
        %803 = vst.msk [vmem:[%s394] sm:$0xf] %vm802, %v801
        %s804 = sand.u32 %s215, 1
        %s805 = scalar_lea.sflag [#allocation4], %s804
        %s806 = sand.u32 %s215, 1
        %s807 = smul.addr %s806, 4
        %s808 = scalar_lea.vmem [#allocation10], %s807
        // Predicated region
        $region69: #{tpu_custom_call.1} parent=51 // pred_check
          %p809 = pneg %p225
        $region70: #{tpu_custom_call.1} parent=51 // pred_check_branch
          %811 = sbr.rel (%p809) target = $region72
        $region71: #{tpu_custom_call.1} parent=51 // pred_region
          %813 = vsyncadd %s805, 0
          %s814 = smul.addr %s29, 4
          %s815 = scalar_lea.hbm %s8, %s814
          %s817 = sshll.u32 %s808, 4
          %s818 = int_to_ptr.vmem [resolvable:$true] %s817
          %s819 = sshll.u32 %s815, 4
          %s820 = int_to_ptr.hbm [resolvable:$true] %s819
          %822 = dma.vmem_to_hbm [thread:$0]  %s818, 64, %s820, %s805
        $region72: #{tpu_custom_call.1} parent=51 // pred_fallthru
          _
      $region52: #{tpu_custom_call.1} parent=5 // pred_fallthru
        _
      %p823 = scmp.le.s32.totalorder 2, %s24
      // Predicated region
      $region73: #{tpu_custom_call.1} parent=5 // pred_check
        %p824 = pneg %p823
      $region74: #{tpu_custom_call.1} parent=5 // pred_check_branch
        %826 = sbr.rel (%p824) target = $region76
      $region75: #{tpu_custom_call.1} parent=5 // pred_region
        %s827 = ssub.s32 %s24, 2
        // Predicated region
        $region77: #{tpu_custom_call.1} parent=75 // pred_check
          %p828 = pneg %p231
        $region78: #{tpu_custom_call.1} parent=75 // pred_check_branch
          %830 = sbr.rel (%p828) target = $region80
        $region79: #{tpu_custom_call.1} parent=75 // pred_region
          %s831 = sand.u32 %s216, 1
          %s832 = scalar_lea.sflag [#allocation4], %s831
          %s833 = sand.u32 %s216, 1
          %s834 = smul.addr %s833, 4
          %s835 = scalar_lea.vmem [#allocation10], %s834
          %837 = dma.done %s832, 64
        $region80: #{tpu_custom_call.1} parent=75 // pred_fallthru
          _
      $region76: #{tpu_custom_call.1} parent=5 // pred_fallthru
        _
    $region6: #{tpu_custom_call.1} parent=1 // loop_footer
      %s28 = sadd.s32 1, %s24
    $region7: #{tpu_custom_call.1} parent=1 // loop_footer_branch
      %23 = sbr.rel target = $region3
    $region8: #{tpu_custom_call.1} parent=1 // loop_exit
      _
    %838 = vsyncpa [#allocation3], 1
    %s839 = scalar_lea.sflag [#allocation3], 1
    %840 = vsyncpa %s839, 1
    %841 = vsyncpa [#allocation6], 1
    %s842 = scalar_lea.sflag [#allocation6], 1
    %843 = vsyncpa %s842, 1
    %844 = vsyncpa [#allocation9], 1
    %845 = vsyncpa [#allocation4], 1
    %s846 = scalar_lea.sflag [#allocation4], 1
    %847 = vsyncpa %s846, 1

</llo_original>
